<compile_context>
chip_gen: v7x
topology: tpu7x:2x2x1
jax: 0.10.0
libtpu: 0.0.40
codegen_flags: <defaults>
</compile_context>

<pallas_src>
import functools

import jax
import jax.numpy as jnp
from jax.experimental import pallas as pl
from jax.experimental.pallas import tpu as pltpu

_EPS = 1e-5


# ----------------------------------------------------------- chip-aware budgets
@functools.lru_cache(maxsize=1)
def _vmem_capacity_bytes():
    try:
        cap = int(getattr(pltpu.get_tpu_info(), "vmem_capacity_bytes", 0))
        if cap > 0:
            return cap
    except Exception:
        pass
    return 64 << 20                     # conservative default: v7x per-TC VMEM


@functools.lru_cache(maxsize=1)
def _default_tile_budget():
    # Per-grid-step overhead is ~0.35us regardless of tile size, so tiles should
    # be several MiB.  Bigger on 128-MiB-VMEM chips (v5e/v6e), smaller on v7x.
    return (12 << 20) if _vmem_capacity_bytes() >= (128 << 20) else (6 << 20)


@functools.lru_cache(maxsize=1)
def _vmem_ceiling():
    cap = _vmem_capacity_bytes()
    return int(max(min(96 << 20, cap - (8 << 20)), 32 << 20))


def _vmem_limit(t_r, t_hw, itemsize, n_tile_bufs):
    tile = t_r * t_hw * int(itemsize)
    tile_f32 = t_r * t_hw * 4
    # n_tile_bufs double-buffered streaming tiles + headroom for in-kernel f32
    # temporaries (cast + square) + 2 MiB slack for accumulators / compiler scratch.
    want = n_tile_bufs * tile + 2 * tile_f32 + (2 << 20)
    return int(min(max(want, 16 << 20), _vmem_ceiling()))


# ----------------------------------------------------------- phase 1: statistics
def _bn_stats_kernel(x_ref, sum_ref, sumsq_ref):
    # x_ref: (t_r, t_hw) tile; sum_ref/sumsq_ref: (t_r, 1) f32 partial sums,
    # resident across the innermost ('arbitrary') HW grid axis.
    @pl.when(pl.program_id(1) == 0)
    def _():
        sum_ref[...] = jnp.zeros_like(sum_ref)
        sumsq_ref[...] = jnp.zeros_like(sumsq_ref)

    x = x_ref[...].astype(jnp.float32)      # cast in-register; HBM stays input dtype
    sum_ref[...] += jnp.sum(x, axis=1, keepdims=True)        # lane (XLU) reduce
    sumsq_ref[...] += jnp.sum(x * x, axis=1, keepdims=True)


# ------------------------------------------------------------ phase 2: normalize
def _bn_norm_kernel(x_ref, scale_ref, shift_ref, o_ref):
    # x_ref/o_ref: (t_r, t_hw); scale_ref/shift_ref: (t_r, 1) f32 per-row
    # (resident across the HW axis -- block index independent of j).
    x = x_ref[...].astype(jnp.float32)
    o_ref[...] = (x * scale_ref[...] + shift_ref[...]).astype(o_ref.dtype)


# --------------------------------------------------------------------- plumbing
def _divisors(n):
    ds = []
    i = 1
    while i * i <= n:
        if n % i == 0:
            ds.append(i)
            if i != n // i:
                ds.append(n // i)
        i += 1
    return sorted(ds)


def _pick_tiles(rows, hw, itemsize, max_tile_bytes):
    """Pick (t_r, t_hw): t_hw a multiple-of-128 divisor of HW (else full HW),
    t_r a multiple-of-8 divisor of rows (else full rows), maximizing tile bytes
    under the budget (ties broken toward wider lanes for contiguous DMA)."""
    itemsize = int(itemsize)
    lane_cands = [d for d in _divisors(hw) if d % 128 == 0] or [hw]
    row_cands = sorted({d for d in _divisors(rows) if d % 8 == 0} | {rows})
    best = None
    for t_hw in lane_cands:
        for t_r in row_cands:
            nbytes = t_r * t_hw * itemsize
            if nbytes <= max_tile_bytes:
                key = (nbytes, t_hw)
                if best is None or key > best[0]:
                    best = (key, (t_r, t_hw))
    if best is None:                        # nothing fits: smallest legal tile
        return min(row_cands), min(lane_cands)
    return best[1]


def _bn_stats(x2, t_r, t_hw):
    rows, hw = x2.shape
    grid = (rows // t_r, hw // t_hw)
    return pl.pallas_call(
        _bn_stats_kernel,
        out_shape=(jax.ShapeDtypeStruct((rows, 1), jnp.float32),
                   jax.ShapeDtypeStruct((rows, 1), jnp.float32)),
        grid=grid,
        in_specs=[pl.BlockSpec((t_r, t_hw), lambda i, j: (i, j))],
        out_specs=(pl.BlockSpec((t_r, 1), lambda i, j: (i, 0)),
                   pl.BlockSpec((t_r, 1), lambda i, j: (i, 0))),
        compiler_params=pltpu.CompilerParams(
            # Row axis carries independent partial sums -> 'parallel' (megacore /
            # v7x dual-TC sharding); HW axis is the sequential reduction.
            dimension_semantics=("parallel", "arbitrary"),
            vmem_limit_bytes=_vmem_limit(t_r, t_hw, x2.dtype.itemsize, 2),
        ),
    )(x2)


def _bn_norm(x2, scale_r, shift_r, t_r, t_hw):
    rows, hw = x2.shape
    grid = (rows // t_r, hw // t_hw)
    return pl.pallas_call(
        _bn_norm_kernel,
        out_shape=jax.ShapeDtypeStruct((rows, hw), x2.dtype),
        grid=grid,
        in_specs=[pl.BlockSpec((t_r, t_hw), lambda i, j: (i, j)),
                  pl.BlockSpec((t_r, 1), lambda i, j: (i, 0)),
                  pl.BlockSpec((t_r, 1), lambda i, j: (i, 0))],
        out_specs=pl.BlockSpec((t_r, t_hw), lambda i, j: (i, j)),
        compiler_params=pltpu.CompilerParams(
            dimension_semantics=("parallel", "parallel"),
            vmem_limit_bytes=_vmem_limit(t_r, t_hw, x2.dtype.itemsize, 4),
        ),
    )(x2, scale_r, shift_r)


class MaybeBatchNorm2d:
    """JAX/Pallas port of MaybeBatchNorm2d (training-mode normalization path)."""

    def __init__(self, n_ftr, affine, use_bn, key=None, max_tile_bytes=None):
        self.n_ftr = n_ftr
        self.affine = affine
        self.use_bn = use_bn
        self.max_tile_bytes = (int(max_tile_bytes) if max_tile_bytes is not None
                               else _default_tile_budget())
        if affine:
            # Deterministic, non-trivial affine params to exercise the path.
            if key is None:
                key = jax.random.PRNGKey(42)
            kg, kb = jax.random.split(key)
            self.gamma = (1.0 + 0.1 * jax.random.normal(kg, (n_ftr,))).astype(jnp.float32)
            self.beta = (0.1 * jax.random.normal(kb, (n_ftr,))).astype(jnp.float32)
        else:
            self.gamma = jnp.ones((n_ftr,), jnp.float32)
            self.beta = jnp.zeros((n_ftr,), jnp.float32)
        # TODO(synk): nn.BatchNorm2d running_mean/running_var momentum updates (and
        # their unbiased variance) are module state, not forward math; only the
        # training-mode normalization output is implemented here.

    def __call__(self, x_nchw):
        if not self.use_bn:
            return x_nchw
        n, c, h, w = x_nchw.shape
        assert c == self.n_ftr
        hw = h * w
        rows = n * c
        x2 = x_nchw.reshape(rows, hw)                 # free view, no HBM transpose
        t_r, t_hw = _pick_tiles(rows, hw, x2.dtype.itemsize, self.max_tile_bytes)

        # Phase 1: per-row partial sums (single pass over x), folded to per-channel.
        row_sum, row_sumsq = _bn_stats(x2, t_r, t_hw)           # (rows, 1) f32 each
        ch_sum = row_sum.reshape(n, c).sum(axis=0)              # (C,)
        ch_sumsq = row_sumsq.reshape(n, c).sum(axis=0)
        m = jnp.float32(n * hw)
        mean = ch_sum / m
        # NOTE: E[x^2]-E[x]^2 in f32 can lose precision when |mean| >> std; the
        # clamp guards against tiny negative variances from cancellation.
        var = jnp.maximum(ch_sumsq / m - mean * mean, 0.0)      # biased var (norm path)
        inv_std = jax.lax.rsqrt(var + _EPS)
        g = self.gamma.astype(jnp.float32)
        b = self.beta.astype(jnp.float32)
        scale_c = g * inv_std                                   # tiny (C,) host math
        shift_c = b - mean * scale_c
        scale_r = jnp.tile(scale_c, n).reshape(rows, 1)         # per-row, a few KiB
        shift_r = jnp.tile(shift_c, n).reshape(rows, 1)

        # Phase 2: streamed normalize (second pass over x, one write).
        y2 = _bn_norm(x2, scale_r, shift_r, t_r, t_hw)
        return y2.reshape(n, c, h, w)


def _reference_bn(x_nchw, gamma, beta):
    x = x_nchw.astype(jnp.float32)
    mean = jnp.mean(x, axis=(0, 2, 3), keepdims=True)
    var = jnp.mean((x - mean) ** 2, axis=(0, 2, 3), keepdims=True)
    y = (x - mean) / jnp.sqrt(var + _EPS)
    return y * gamma.reshape(1, -1, 1, 1) + beta.reshape(1, -1, 1, 1)


if __name__ == "__main__":
    key = jax.random.PRNGKey(0)
    kx, kx2, kx3, kx4, kx5, kp = jax.random.split(key, 6)

    # --- test 1: small f32, single-tile grid ----------------------------------
    N, C, H, W = 2, 4, 16, 16
    x = jax.random.normal(kx, (N, C, H, W), dtype=jnp.float32)
    mod = MaybeBatchNorm2d(n_ftr=C, affine=True, use_bn=True, key=kp)
    y = jax.block_until_ready(mod(x))
    y_ref = _reference_bn(x, mod.gamma, mod.beta)
    assert y.shape == x.shape
    assert jnp.max(jnp.abs(y - y_ref)) < 1e-4

    # --- test 2: multi-tile grid, offset mean (partial-sum accumulation) ------
    N2, C2, H2, W2 = 2, 8, 32, 32                       # rows=16, HW=1024
    x2 = 1.5 + jax.random.normal(kx2, (N2, C2, H2, W2), dtype=jnp.float32)
    mod2 = MaybeBatchNorm2d(n_ftr=C2, affine=True, use_bn=True, key=kp,
                            max_tile_bytes=4096)        # -> t_r=8, t_hw=128, grid=(2, 8)
    y2 = jax.block_until_ready(mod2(x2))
    y2_ref = _reference_bn(x2, mod2.gamma, mod2.beta)
    assert jnp.max(jnp.abs(y2 - y2_ref)) < 1e-3

    # --- test 3: bf16 streamed input, f32 accumulation -------------------------
    xb = jax.random.normal(kx3, (2, 4, 16, 16), dtype=jnp.bfloat16)
    mod3 = MaybeBatchNorm2d(n_ftr=4, affine=True, use_bn=True, key=kp)
    yb = jax.block_until_ready(mod3(xb))
    assert yb.dtype == jnp.bfloat16
    yb_ref = _reference_bn(xb, mod3.gamma, mod3.beta)
    assert jnp.max(jnp.abs(yb.astype(jnp.float32) - yb_ref)) < 5e-2

    # --- test 4: awkward shapes (N*C, HW not multiples of 8/128) ---------------
    x4 = jax.random.normal(kx4, (3, 5, 8, 8), dtype=jnp.float32)
    mod4 = MaybeBatchNorm2d(n_ftr=5, affine=True, use_bn=True, key=kp)
    y4 = jax.block_until_ready(mod4(x4))
    y4_ref = _reference_bn(x4, mod4.gamma, mod4.beta)
    assert jnp.max(jnp.abs(y4 - y4_ref)) < 1e-4

    # --- test 5: wider channel count, multi-row-block 'parallel' grid ----------
    x5 = jax.random.normal(kx5, (2, 64, 32, 32), dtype=jnp.float32)
    mod5 = MaybeBatchNorm2d(n_ftr=64, affine=False, use_bn=True,
                            max_tile_bytes=128 << 10)   # -> t_r=32, t_hw=1024, grid=(4, 1)
    y5 = jax.block_until_ready(mod5(x5))
    y5_ref = _reference_bn(x5, mod5.gamma, mod5.beta)
    assert jnp.max(jnp.abs(y5 - y5_ref)) < 1e-4

    # --- test 6: use_bn=False is identity ---------------------------------------
    mod_id = MaybeBatchNorm2d(n_ftr=C, affine=True, use_bn=False)
    y_id = jax.block_until_ready(mod_id(x))
    assert jnp.array_equal(y_id, x)

    print("KERNEL_OK")
</pallas_src>

<mosaic_0001>
module attributes {stable_mosaic.version = 11 : i64} {
  func.func @_bn_stats_kernel(%arg0: i32, %arg1: i32, %arg2: memref<8x256xf32, #tpu.memory_space<vmem>>, %arg3: memref<8x1xf32, #tpu.memory_space<vmem>>, %arg4: memref<8x1xf32, #tpu.memory_space<vmem>>) attributes {dimension_semantics = [#tpu.dimension_semantics<parallel>, #tpu.dimension_semantics<arbitrary>], iteration_bounds = array<i64: 1, 1>, scalar_prefetch = 0 : i64, scratch_operands = 0 : i64, tpu.core_type = #tpu.core_type<tc>, window_params = [{transform_indices = @transform_0, window_bounds = array<i64: 8, 256>}, {transform_indices = @transform_1, window_bounds = array<i64: 8, 1>}, {transform_indices = @transform_2, window_bounds = array<i64: 8, 1>}]} {
    %c0_i32 = arith.constant 0 : i32
    %0 = arith.cmpi eq, %arg1, %c0_i32 : i32
    %1 = arith.extui %0 : i1 to i32
    %c0_i32_0 = arith.constant 0 : i32
    %2 = arith.cmpi ne, %1, %c0_i32_0 : i32
    scf.if %2 {
      %cst_11 = arith.constant 0.000000e+00 : f32
      %15 = vector.broadcast %cst_11 : f32 to vector<8x1xf32>
      %c0_12 = arith.constant 0 : index
      %c0_13 = arith.constant 0 : index
      %16 = vector.load %arg3[%c0_12, %c0_13] : memref<8x1xf32, #tpu.memory_space<vmem>>, vector<8x1xf32>
      tpu.vector_store %arg3[%c0_12, %c0_13], %15 {strides = array<i32>} : memref<8x1xf32, #tpu.memory_space<vmem>>, vector<8x1xf32>,
      %cst_14 = arith.constant 0.000000e+00 : f32
      %17 = vector.broadcast %cst_14 : f32 to vector<8x1xf32>
      %c0_15 = arith.constant 0 : index
      %c0_16 = arith.constant 0 : index
      %18 = vector.load %arg4[%c0_15, %c0_16] : memref<8x1xf32, #tpu.memory_space<vmem>>, vector<8x1xf32>
      tpu.vector_store %arg4[%c0_15, %c0_16], %17 {strides = array<i32>} : memref<8x1xf32, #tpu.memory_space<vmem>>, vector<8x1xf32>,
    } else {
    }
    %c0 = arith.constant 0 : index
    %c0_1 = arith.constant 0 : index
    %3 = vector.load %arg2[%c0, %c0_1] : memref<8x256xf32, #tpu.memory_space<vmem>>, vector<8x256xf32>
    %c0_2 = arith.constant 0 : index
    %c0_3 = arith.constant 0 : index
    %4 = vector.load %arg3[%c0_2, %c0_3] : memref<8x1xf32, #tpu.memory_space<vmem>>, vector<8x1xf32>
    %cst = arith.constant dense<0.000000e+00> : vector<8xf32>
    %5 = vector.multi_reduction <add>, %3, %cst [1] : vector<8x256xf32> to vector<8xf32>
    %6 = vector.shape_cast %5 : vector<8xf32> to vector<8x1xf32>
    %7 = arith.addf %4, %6 : vector<8x1xf32>
    %c0_4 = arith.constant 0 : index
    %c0_5 = arith.constant 0 : index
    %8 = vector.load %arg3[%c0_4, %c0_5] : memref<8x1xf32, #tpu.memory_space<vmem>>, vector<8x1xf32>
    tpu.vector_store %arg3[%c0_4, %c0_5], %7 {strides = array<i32>} : memref<8x1xf32, #tpu.memory_space<vmem>>, vector<8x1xf32>,
    %c0_6 = arith.constant 0 : index
    %c0_7 = arith.constant 0 : index
    %9 = vector.load %arg4[%c0_6, %c0_7] : memref<8x1xf32, #tpu.memory_space<vmem>>, vector<8x1xf32>
    %10 = arith.mulf %3, %3 : vector<8x256xf32>
    %cst_8 = arith.constant dense<0.000000e+00> : vector<8xf32>
    %11 = vector.multi_reduction <add>, %10, %cst_8 [1] : vector<8x256xf32> to vector<8xf32>
    %12 = vector.shape_cast %11 : vector<8xf32> to vector<8x1xf32>
    %13 = arith.addf %9, %12 : vector<8x1xf32>
    %c0_9 = arith.constant 0 : index
    %c0_10 = arith.constant 0 : index
    %14 = vector.load %arg4[%c0_9, %c0_10] : memref<8x1xf32, #tpu.memory_space<vmem>>, vector<8x1xf32>
    tpu.vector_store %arg4[%c0_9, %c0_10], %13 {strides = array<i32>} : memref<8x1xf32, #tpu.memory_space<vmem>>, vector<8x1xf32>,
    return
  }
  func.func @transform_0(%arg0: i32, %arg1: i32) -> (i32, i32) {
    %c0_i32 = arith.constant 0 : i32
    return %arg0, %arg1 : i32, i32
  }
  func.func @transform_1(%arg0: i32, %arg1: i32) -> (i32, i32) {
    %c0_i32 = arith.constant 0 : i32
    %c0_i32_0 = arith.constant 0 : i32
    return %arg0, %c0_i32 : i32, i32
  }
  func.func @transform_2(%arg0: i32, %arg1: i32) -> (i32, i32) {
    %c0_i32 = arith.constant 0 : i32
    %c0_i32_0 = arith.constant 0 : i32
    return %arg0, %c0_i32 : i32, i32
  }
}

</mosaic_0001>

<llo_original>
// kernel: tpu_custom_call.1
$region0: #{tpu_custom_call.1}
  #allocation0 [shape = 'u32[]', space=smem, size = 0x4, offset = 0x4, fixed_abs, tag = 'smem constant byte address 0x4 - core index']
  #allocation1 [shape = 'u32[144,128]{1,0:T(1,128)}', space=vmem, size = 0x12000, scoped, tag = 'internal scratch']
  %s0 = inlined_call_operand.hbm [shape: f32[8,256], index: 0, kind: input, shape index: {}]
  %s1 = inlined_call_operand.vmem [shape: f32[8,1], index: 1, kind: output, shape index: {0}]
  %s2 = inlined_call_operand.vmem [shape: f32[8,1], index: 2, kind: output, shape index: {1}]
  %3 = xla_tuple %s1, %s2
  %s4 = sld [smem:[#allocation0]]
  $region30: #{tpu_custom_call.1} parent=0
    _
  %s6 = ssub.s32 1, %s4
  %s7 = scalar_select 0, %s6, %s4
  $region1: #{tpu_custom_call.1} parent=0
    #allocation2 [shape = 'u8[8192]{0}', space=vmem, size = 0x2000, scoped, tag = 'input window, operand 0, single buffered']
    #allocation3 [shape = 's32[1]{0}', space=sflag, size = 0x4, scoped, tag = 'scoped memory for tpu_custom_call.1']
    %8 = vsyncpa [#allocation3], 0
    // Predicated region
    $region2: #{tpu_custom_call.1} parent=1 // pred_check
      _
    $region3: #{tpu_custom_call.1} parent=1 // pred_check_branch
      %10 = sbr.rel (0) target = $region5
    $region4: #{tpu_custom_call.1} parent=1 // pred_region
      %s12 = ssub.s32 256, 256
      %13 = vsyncadd [#allocation3], %s12
      %s15 = sshll.u32 [#allocation2], 4
      %s16 = int_to_ptr.vmem [resolvable:$true] %s15
      %18 = dma.hbm_to_vmem [thread:$0]  %s0, 256, %s16, [#allocation3]
    $region5: #{tpu_custom_call.1} parent=1 // pred_fallthru
      _
    // Predicated region
    $region6: #{tpu_custom_call.1} parent=1 // pred_check
      _
    $region7: #{tpu_custom_call.1} parent=1 // pred_check_branch
      %20 = sbr.rel (0) target = $region9
    $region8: #{tpu_custom_call.1} parent=1 // pred_region
      %21 = dma.done [#allocation3], 256
    $region9: #{tpu_custom_call.1} parent=1 // pred_fallthru
      _
    %p22 = scmp.eq.s32.totalorder 0, 0
    // Predicated region
    $region10: #{tpu_custom_call.1} parent=1 // pred_check
      %p23 = pneg %p22
    $region11: #{tpu_custom_call.1} parent=1 // pred_check_branch
      %25 = sbr.rel (%p23) target = $region13
    $region12: #{tpu_custom_call.1} parent=1 // pred_region
      %vm26 = vcmask 7168
      %27 = vst.msk [vmem:[%s1] sm:$0xff] %vm26, 0.0
      %28 = vst.msk [vmem:[%s2] sm:$0xff] %vm26, 0.0
    $region13: #{tpu_custom_call.1} parent=1 // pred_fallthru
      _
    %v29 = vld [vmem:[#allocation2] sm:$0xff]
    %v30 = vld [vmem:[#allocation2 + $0x8] sm:$0xff]
    %v31 = vld [vmem:[%s1] sm:$0xff]
    %v32 = vadd.f32 %v29, %v30
    %33 = vadd.xlane.f32.xlu0 %v32
    %v34 = vpop.xlane.xlu0 %33
    %v35 = vadd.f32 %v31, %v34
    %vm36 = vcmask 7168
    %37 = vst.msk [vmem:[%s1] sm:$0xff] %vm36, %v35
    %v38 = vld [vmem:[%s2] sm:$0xff]
    %v39 = vmul.f32 %v29, %v29
    %v40 = vmul.f32 %v30, %v30
    %v41 = vadd.f32 %v39, %v40
    %42 = vadd.xlane.f32.xlu0 %v41
    %v43 = vpop.xlane.xlu0 %42
    %v44 = vadd.f32 %v38, %v43
    %45 = vst.msk [vmem:[%s2] sm:$0xff] %vm36, %v44
    // Predicated region
    $region14: #{tpu_custom_call.1} parent=1 // pred_check
      _
    $region15: #{tpu_custom_call.1} parent=1 // pred_check_branch
      %47 = sbr.rel (0) target = $region17
    $region16: #{tpu_custom_call.1} parent=1 // pred_region
      _
    $region17: #{tpu_custom_call.1} parent=1 // pred_fallthru
      _
    // Predicated region
    $region18: #{tpu_custom_call.1} parent=1 // pred_check
      _
    $region19: #{tpu_custom_call.1} parent=1 // pred_check_branch
      %49 = sbr.rel (0) target = $region21
    $region20: #{tpu_custom_call.1} parent=1 // pred_region
      _
    $region21: #{tpu_custom_call.1} parent=1 // pred_fallthru
      _
    // Predicated region
    $region22: #{tpu_custom_call.1} parent=1 // pred_check
      _
    $region23: #{tpu_custom_call.1} parent=1 // pred_check_branch
      %51 = sbr.rel (0) target = $region25
    $region24: #{tpu_custom_call.1} parent=1 // pred_region
      _
    $region25: #{tpu_custom_call.1} parent=1 // pred_fallthru
      _
    // Predicated region
    $region26: #{tpu_custom_call.1} parent=1 // pred_check
      _
    $region27: #{tpu_custom_call.1} parent=1 // pred_check_branch
      %53 = sbr.rel (0) target = $region29
    $region28: #{tpu_custom_call.1} parent=1 // pred_region
      _
    $region29: #{tpu_custom_call.1} parent=1 // pred_fallthru
      _
    %54 = vsyncpa [#allocation3], 1

</llo_original>
